<compile_context>
chip_gen: v7x
topology: tpu7x:2x2x1
jax: 0.10.0
libtpu: 0.0.40
codegen_flags: <defaults>
</compile_context>

<pallas_src>
import jax
import jax.numpy as jnp
from jax.experimental import pallas as pl
from jax.experimental.pallas import tpu as pltpu


# --------------------------------------------------------------------------- #
# Chip / dtype aware sizing                                                    #
# --------------------------------------------------------------------------- #

def _chip_budgets():
    """(target DMA block bytes, vmem_limit_bytes or None, est. HBM bytes/s)."""
    vmem_cap = None
    try:
        info = pltpu.get_tpu_info()
        vmem_cap = int(getattr(info, "vmem_capacity_bytes", 0)) or None
    except Exception:
        vmem_cap = None
    if vmem_cap is None:
        # Unknown chip: stay inside every generation's default scoped VMEM limit.
        return 2 << 20, None, 0.8e12
    if vmem_cap >= (96 << 20):
        # v5e / v6e: 128 MiB physical VMEM.  8 MiB blocks (double-buffered) plus
        # in-kernel f32 temporaries fit comfortably under a 100 MiB limit.
        return 8 << 20, 100 << 20, 1.3e12
    # v7x: 64 MiB physical VMEM per TensorCore -- keep blocks smaller.
    return 4 << 20, 48 << 20, 3.2e12


def _choose_tiles(n, c, itemsize, target_bytes):
    """Pick (tile_n, tile_c) so one *input-dtype* block is ~target_bytes."""
    row_align = 8 * max(1, 4 // itemsize)          # native sublane tile: 8/16/32
    if row_align * itemsize * c <= target_bytes:
        tile_c = c                                 # full rows fit: no column tiling
    else:
        tile_c = max(128, (target_bytes // (row_align * itemsize) // 128) * 128)
    tile_n = max(row_align, target_bytes // max(itemsize * tile_c, 1))
    tile_n = max(row_align, (min(tile_n, 4096) // row_align) * row_align)
    if tile_n >= n:
        tile_n = n                                 # full-extent row block is legal
    return tile_n, tile_c


def _sanitize_row_tile(tile, n, row_align):
    tile = max(1, min(int(tile), n))
    if tile < n:
        tile = max(row_align, (tile // row_align) * row_align)
    return min(tile, n)


def _sanitize_col_tile(tile, c):
    tile = max(1, min(int(tile), c))
    if tile < c:
        tile = max(128, (tile // 128) * 128)
    return min(tile, c)


# --------------------------------------------------------------------------- #
# Path 1: row/column-tiled streaming reduction                                 #
# --------------------------------------------------------------------------- #

def _make_streaming_kernel(tile_n, tile_c):
    fold = (tile_n % 8 == 0) and (tile_c % 128 == 0)

    def kernel(x_ref, t_ref, o_ref):
        # x_ref : (tile_n, tile_c) logits block (input dtype), VMEM
        # t_ref : (tile_n, 1) int32 targets block (-1 for padded rows), VMEM
        # o_ref : (8, 128) f32 partial sums for this row tile; resident across
        #         the column (reduction) axis -> acts as the accumulator.
        j = pl.program_id(1)

        @pl.when(j == 0)
        def _init():
            o_ref[...] = jnp.zeros_like(o_ref)

        x = x_ref[...].astype(jnp.float32)
        # Fold the column-tile offset into the small (tile_n,1) targets instead
        # of adding j*tile_c over the whole block.  Padded rows carry target -1
        # and never match; padded columns past C never match since targets < C.
        t_local = t_ref[...] - j * tile_c
        col = jax.lax.broadcasted_iota(jnp.int32, (tile_n, tile_c), 1)
        picked = jnp.where(col == t_local, x, 0.0)

        if fold:
            # Pure vreg-add fold onto the native (8,128) tile: no cross-lane
            # reduce and no per-step scalar/SMEM dependency in the inner loop.
            part = picked.reshape(tile_n, tile_c // 128, 128).sum(axis=1)
            part = part.reshape(tile_n // 8, 8, 128).sum(axis=0)
        else:
            # Small / unaligned blocks: scalar block sum placed at element (0,0).
            first = ((jax.lax.broadcasted_iota(jnp.int32, (8, 128), 0) == 0)
                     & (jax.lax.broadcasted_iota(jnp.int32, (8, 128), 1) == 0))
            part = jnp.where(first, jnp.sum(picked), jnp.float32(0.0))
        o_ref[...] += part

    return kernel


def _target_logit_streaming(x, t_i32, target_bytes, vmem_limit,
                            tile_rows=None, tile_cols=None):
    n, c = x.shape
    itemsize = jnp.dtype(x.dtype).itemsize
    row_align = 8 * max(1, 4 // itemsize)
    tile_n, tile_c = _choose_tiles(n, c, itemsize, target_bytes)
    if tile_rows is not None:
        tile_n = _sanitize_row_tile(tile_rows, n, row_align)
    if tile_cols is not None:
        tile_c = _sanitize_col_tile(tile_cols, c)

    grid_rows = pl.cdiv(n, tile_n)
    grid_cols = pl.cdiv(c, tile_c)

    # Pad targets with -1 for the padded tail of the last row tile, so the
    # kernel needs no per-element row-validity mask.
    n_pad = grid_rows * tile_n
    t2 = t_i32.reshape(n, 1)
    if n_pad != n:
        t2 = jnp.pad(t2, ((0, n_pad - n), (0, 0)), constant_values=-1)

    grid_spec = pltpu.PrefetchScalarGridSpec(
        num_scalar_prefetch=0,
        grid=(grid_rows, grid_cols),
        in_specs=[
            pl.BlockSpec((tile_n, tile_c), lambda i, j: (i, j)),   # stream logits
            pl.BlockSpec((tile_n, 1), lambda i, j: (i, 0)),        # per-row targets
        ],
        # One (8,128) partial-sum block per row tile; since each row tile owns
        # its own output block, the row axis can be "parallel" (dual-TC on v7x).
        out_specs=pl.BlockSpec((8, 128), lambda i, j: (i, 0)),
    )
    cp_kwargs = dict(dimension_semantics=("parallel", "arbitrary"))
    if vmem_limit is not None:
        cp_kwargs["vmem_limit_bytes"] = int(vmem_limit)

    partials = pl.pallas_call(
        _make_streaming_kernel(tile_n, tile_c),
        out_shape=jax.ShapeDtypeStruct((grid_rows * 8, 128), jnp.float32),
        grid_spec=grid_spec,
        compiler_params=pltpu.CompilerParams(**cp_kwargs),
    )(x, t2)
    # Tiny finalize in plain JAX: sum the per-row-tile partials, mean, negate.
    return -(jnp.sum(partials) / jnp.float32(n))


# --------------------------------------------------------------------------- #
# Path 2: scalar-prefetch, data-dependent column-block gather (vocab-scale C)  #
# --------------------------------------------------------------------------- #

def _make_gather_kernel(n_rows, blocks_per_row, sub_rows):
    def kernel(t_smem, x_ref, o_ref, acc_ref):
        # t_smem : (N,) int32 targets, SMEM (scalar-prefetched)
        # x_ref  : (sub_rows, 128) block of the (N*C//128, 128) flat logits view
        # o_ref  : (1, 1) float32 result, SMEM
        # acc_ref: (1,)   float32 running sum, SMEM scratch
        r = pl.program_id(0)

        @pl.when(r == 0)
        def _init():
            acc_ref[0] = jnp.float32(0.0)

        t = t_smem[r]
        flat = r * blocks_per_row + t // 128
        sub = flat % sub_rows
        lane = t % 128

        x = x_ref[...].astype(jnp.float32)
        subs = jax.lax.broadcasted_iota(jnp.int32, (sub_rows, 128), 0)
        lanes = jax.lax.broadcasted_iota(jnp.int32, (sub_rows, 128), 1)
        acc_ref[0] += jnp.sum(jnp.where((subs == sub) & (lanes == lane), x, 0.0))

        @pl.when(r == pl.num_programs(0) - 1)
        def _finalize():
            o_ref[0, 0] = -(acc_ref[0] / jnp.float32(n_rows))

    return kernel


def _target_logit_gather(x, t_i32):
    n, c = x.shape
    itemsize = jnp.dtype(x.dtype).itemsize
    if c % 128 != 0:
        raise ValueError("column-gather path requires C % 128 == 0")
    if itemsize not in (1, 2, 4):
        raise ValueError("column-gather path requires a 1/2/4-byte dtype")
    sub_rows = 8 * max(1, 4 // itemsize)          # f32 -> 8, bf16 -> 16, int8 -> 32
    blocks_per_row = c // 128
    xf = x.reshape(n * blocks_per_row, 128)       # free, layout-preserving view

    def x_index_map(r, t_ref):
        flat = r * blocks_per_row + t_ref[r] // 128
        return (flat // sub_rows, 0)

    grid_spec = pltpu.PrefetchScalarGridSpec(
        num_scalar_prefetch=1,
        grid=(n,),
        in_specs=[pl.BlockSpec((sub_rows, 128), x_index_map)],
        out_specs=pl.BlockSpec(memory_space=pltpu.MemorySpace.SMEM),
        scratch_shapes=[pltpu.SMEM((1,), jnp.float32)],
    )
    # TODO(synk): batch R rows per step with manual make_async_copy gathers into
    # a double-buffered VMEM scratch (P4) to amortize per-step overhead.
    out = pl.pallas_call(
        _make_gather_kernel(n, blocks_per_row, sub_rows),
        out_shape=jax.ShapeDtypeStruct((1, 1), jnp.float32),
        grid_spec=grid_spec,
        compiler_params=pltpu.CompilerParams(dimension_semantics=("arbitrary",)),
    )(t_i32, xf)
    return out[0, 0]


# --------------------------------------------------------------------------- #
# Public wrapper                                                               #
# --------------------------------------------------------------------------- #

def target_logit(x, target, *, column_gather=None, tile_rows=None, tile_cols=None):
    """Pallas equivalent of Target_Logit.forward(input, target) -> scalar."""
    if x.ndim != 2:
        raise ValueError("input must be [N, C]")
    n, c = x.shape
    t_i32 = target.reshape(n).astype(jnp.int32)
    itemsize = jnp.dtype(x.dtype).itemsize

    target_bytes, vmem_limit, hbm_bw = _chip_budgets()

    if column_gather is None:
        # Break-even: streaming pays ~C*itemsize/HBM_BW per row; the gather path
        # pays ~0.45 us of grid-step / DMA-latency overhead per row.  Only the
        # vocab-scale regime clears that bar (~150k f32 columns on v6e, more on
        # v7x, double for bf16).
        c_min = max(1 << 16, int(0.45e-6 * hbm_bw / itemsize))
        column_gather = (c % 128 == 0) and itemsize in (1, 2, 4) and c >= c_min

    if column_gather:
        result = _target_logit_gather(x, t_i32)
    else:
        result = _target_logit_streaming(x, t_i32, target_bytes, vmem_limit,
                                         tile_rows=tile_rows, tile_cols=tile_cols)
    return result.astype(x.dtype)


if __name__ == "__main__":
    key = jax.random.PRNGKey(0)
    k1, k2, k3, k4, k5, k6 = jax.random.split(key, 6)

    def ref(xa, ta):
        return -jnp.mean(jnp.take_along_axis(
            xa.astype(jnp.float32), ta.reshape(-1, 1).astype(jnp.int32), axis=1))

    # 1) small f32 (batch=8, classes=32): single block, unaligned fallback path.
    n1, c1 = 8, 32
    x1 = jax.random.normal(k1, (n1, c1), dtype=jnp.float32)
    t1 = jax.random.randint(k2, (n1,), 0, c1, dtype=jnp.int32)
    r1 = target_logit(x1, t1)
    jax.block_until_ready(r1)
    assert jnp.allclose(r1, ref(x1, t1), atol=1e-5, rtol=1e-5), (r1, ref(x1, t1))

    # 2) bf16, multi row/column tiles with a padded last row tile (targets padded
    #    with -1), vector-fold accumulation, parallel row axis.
    n2, c2 = 20, 256
    x2 = jax.random.normal(k3, (n2, c2), dtype=jnp.float32).astype(jnp.bfloat16)
    t2 = jax.random.randint(k4, (n2,), 0, c2, dtype=jnp.int32)
    r2 = target_logit(x2, t2, tile_rows=16, tile_cols=128)
    jax.block_until_ready(r2)
    assert jnp.allclose(r2.astype(jnp.float32), ref(x2, t2), atol=2e-2, rtol=2e-2), (
        r2, ref(x2, t2))

    # 3) data-dependent column-block gather path, f32 (8,128) sub-tiles (forced).
    x3 = x2.astype(jnp.float32)
    r3 = target_logit(x3, t2, column_gather=True)
    jax.block_until_ready(r3)
    assert jnp.allclose(r3, ref(x3, t2), atol=1e-5, rtol=1e-5), (r3, ref(x3, t2))

    # 4) gather path with bf16 -> native (16,128) sub-tile.
    n4, c4 = 16, 256
    x4 = jax.random.normal(k5, (n4, c4), dtype=jnp.float32).astype(jnp.bfloat16)
    t4 = jax.random.randint(k6, (n4,), 0, c4, dtype=jnp.int32)
    r4 = target_logit(x4, t4, column_gather=True)
    jax.block_until_ready(r4)
    assert jnp.allclose(r4.astype(jnp.float32), ref(x4, t4), atol=2e-2, rtol=2e-2), (
        r4, ref(x4, t4))

    print("KERNEL_OK")
</pallas_src>

<mosaic_0001>
module attributes {stable_mosaic.version = 11 : i64} {
  func.func @kernel(%arg0: i32, %arg1: i32, %arg2: memref<8x32xf32, #tpu.memory_space<vmem>>, %arg3: memref<8x1xi32, #tpu.memory_space<vmem>>, %arg4: memref<8x128xf32, #tpu.memory_space<vmem>>) attributes {dimension_semantics = [#tpu.dimension_semantics<parallel>, #tpu.dimension_semantics<arbitrary>], iteration_bounds = array<i64: 1, 1>, scalar_prefetch = 0 : i64, scratch_operands = 0 : i64, tpu.core_type = #tpu.core_type<tc>, window_params = [{transform_indices = @transform_0, window_bounds = array<i64: 8, 32>}, {transform_indices = @transform_1, window_bounds = array<i64: 8, 1>}, {transform_indices = @transform_2, window_bounds = array<i64: 8, 128>}]} {
    %c0_i32 = arith.constant 0 : i32
    %0 = arith.cmpi eq, %arg1, %c0_i32 : i32
    %1 = arith.extui %0 : i1 to i32
    %c0_i32_0 = arith.constant 0 : i32
    %2 = arith.cmpi ne, %1, %c0_i32_0 : i32
    scf.if %2 {
      %cst_12 = arith.constant 0.000000e+00 : f32
      %30 = vector.broadcast %cst_12 : f32 to vector<8x128xf32>
      %c0_13 = arith.constant 0 : index
      %c0_14 = arith.constant 0 : index
      %31 = vector.load %arg4[%c0_13, %c0_14] : memref<8x128xf32, #tpu.memory_space<vmem>>, vector<8x128xf32>
      tpu.vector_store %arg4[%c0_13, %c0_14], %30 {strides = array<i32>} : memref<8x128xf32, #tpu.memory_space<vmem>>, vector<8x128xf32>,
    } else {
    }
    %c0 = arith.constant 0 : index
    %c0_1 = arith.constant 0 : index
    %3 = vector.load %arg2[%c0, %c0_1] : memref<8x32xf32, #tpu.memory_space<vmem>>, vector<8x32xf32>
    %c0_2 = arith.constant 0 : index
    %c0_3 = arith.constant 0 : index
    %4 = vector.load %arg3[%c0_2, %c0_3] : memref<8x1xi32, #tpu.memory_space<vmem>>, vector<8x1xi32>
    %c32_i32 = arith.constant 32 : i32
    %5 = arith.muli %arg1, %c32_i32 : i32
    %6 = vector.broadcast %5 : i32 to vector<8x1xi32>
    %7 = arith.subi %4, %6 : vector<8x1xi32>
    %8 = tpu.iota {dimensions = array<i32: 1>} : vector<8x32xi32>
    %9 = vector.broadcast %7 : vector<8x1xi32> to vector<8x32xi32>
    %10 = arith.cmpi eq, %8, %9 : vector<8x32xi32>
    %cst = arith.constant 0.000000e+00 : f32
    %11 = vector.broadcast %cst : f32 to vector<8x32xf32>
    %12 = arith.select %10, %3, %11 : vector<8x32xi1>, vector<8x32xf32>
    %13 = tpu.iota {dimensions = array<i32: 0>} : vector<8x128xi32>
    %c0_i32_4 = arith.constant 0 : i32
    %14 = vector.broadcast %c0_i32_4 : i32 to vector<8x128xi32>
    %15 = arith.cmpi eq, %13, %14 : vector<8x128xi32>
    %16 = tpu.iota {dimensions = array<i32: 1>} : vector<8x128xi32>
    %c0_i32_5 = arith.constant 0 : i32
    %17 = vector.broadcast %c0_i32_5 : i32 to vector<8x128xi32>
    %18 = arith.cmpi eq, %16, %17 : vector<8x128xi32>
    %19 = arith.andi %15, %18 : vector<8x128xi1>
    %20 = vector.shape_cast %12 : vector<8x32xf32> to vector<1x8x32xf32>
    %cst_6 = arith.constant dense<0.000000e+00> : vector<1xf32>
    %21 = vector.multi_reduction <add>, %20, %cst_6 [1, 2] : vector<1x8x32xf32> to vector<1xf32>
    %22 = vector.shape_cast %21 : vector<1xf32> to vector<1x1x1xf32>
    %23 = vector.extract %22[0, 0, 0] : f32 from vector<1x1x1xf32>
    %cst_7 = arith.constant 0.000000e+00 : f32
    %24 = vector.broadcast %23 : f32 to vector<8x128xf32>
    %25 = vector.broadcast %cst_7 : f32 to vector<8x128xf32>
    %26 = arith.select %19, %24, %25 : vector<8x128xi1>, vector<8x128xf32>
    %c0_8 = arith.constant 0 : index
    %c0_9 = arith.constant 0 : index
    %27 = vector.load %arg4[%c0_8, %c0_9] : memref<8x128xf32, #tpu.memory_space<vmem>>, vector<8x128xf32>
    %28 = arith.addf %27, %26 : vector<8x128xf32>
    %c0_10 = arith.constant 0 : index
    %c0_11 = arith.constant 0 : index
    %29 = vector.load %arg4[%c0_10, %c0_11] : memref<8x128xf32, #tpu.memory_space<vmem>>, vector<8x128xf32>
    tpu.vector_store %arg4[%c0_10, %c0_11], %28 {strides = array<i32>} : memref<8x128xf32, #tpu.memory_space<vmem>>, vector<8x128xf32>,
    return
  }
  func.func @transform_0(%arg0: i32, %arg1: i32) -> (i32, i32) {
    %c0_i32 = arith.constant 0 : i32
    return %arg0, %arg1 : i32, i32
  }
  func.func @transform_1(%arg0: i32, %arg1: i32) -> (i32, i32) {
    %c0_i32 = arith.constant 0 : i32
    %c0_i32_0 = arith.constant 0 : i32
    return %arg0, %c0_i32 : i32, i32
  }
  func.func @transform_2(%arg0: i32, %arg1: i32) -> (i32, i32) {
    %c0_i32 = arith.constant 0 : i32
    %c0_i32_0 = arith.constant 0 : i32
    return %arg0, %c0_i32 : i32, i32
  }
}

</mosaic_0001>

<llo_original>
// kernel: tpu_custom_call.1
$region0: #{tpu_custom_call.1}
  #allocation0 [shape = 'u32[]', space=smem, size = 0x4, offset = 0x4, fixed_abs, tag = 'smem constant byte address 0x4 - core index']
  #allocation1 [shape = 'u32[144,128]{1,0:T(1,128)}', space=vmem, size = 0x12000, scoped, tag = 'internal scratch']
  %s0 = inlined_call_operand.vmem [shape: f32[8,32], index: 0, kind: input, shape index: {}]
  %s1 = inlined_call_operand.vmem [shape: s32[8,1], index: 1, kind: input, shape index: {}]
  %s2 = inlined_call_operand.hbm [shape: f32[8,128], index: 2, kind: output, shape index: {}]
  %s3 = sld [smem:[#allocation0]]
  $region22: #{tpu_custom_call.1} parent=0
    _
  %s5 = ssub.s32 1, %s3
  %s6 = scalar_select 0, %s5, %s3
  $region1: #{tpu_custom_call.1} parent=0
    #allocation2 [shape = 'u8[4096]{0}', space=vmem, size = 0x1000, scoped, tag = 'output window, operand 0, single buffered']
    #allocation3 [shape = 's32[1]{0}', space=sflag, size = 0x4, scoped, tag = 'scoped memory for tpu_custom_call.1']
    %7 = vsyncpa [#allocation3], 0
    // Predicated region
    $region2: #{tpu_custom_call.1} parent=1 // pred_check
      _
    $region3: #{tpu_custom_call.1} parent=1 // pred_check_branch
      %9 = sbr.rel (0) target = $region5
    $region4: #{tpu_custom_call.1} parent=1 // pred_region
      _
    $region5: #{tpu_custom_call.1} parent=1 // pred_fallthru
      _
    // Predicated region
    $region6: #{tpu_custom_call.1} parent=1 // pred_check
      _
    $region7: #{tpu_custom_call.1} parent=1 // pred_check_branch
      %11 = sbr.rel (0) target = $region9
    $region8: #{tpu_custom_call.1} parent=1 // pred_region
      _
    $region9: #{tpu_custom_call.1} parent=1 // pred_fallthru
      _
    %p12 = scmp.eq.s32.totalorder 0, 0
    // Predicated region
    $region10: #{tpu_custom_call.1} parent=1 // pred_check
      %p13 = pneg %p12
    $region11: #{tpu_custom_call.1} parent=1 // pred_check_branch
      %15 = sbr.rel (%p13) target = $region13
    $region12: #{tpu_custom_call.1} parent=1 // pred_region
      %16 = vst [vmem:[#allocation2] sm:$0xff] 0.0
    $region13: #{tpu_custom_call.1} parent=1 // pred_fallthru
      _
    %v17 = vld [vmem:[%s0] sm:$0xff]
    %v18 = vld [vmem:[%s1] sm:$0xff]
    %s19 = smul.u32 0, 32
    %v20 = vstv %s19
    %v21 = vsub.s32 %v18, %v20
    %v22 = vlaneseq
    %v23 = vand.u32 %v22, 127
    %24 = vset.pattern.permute.xlu0 0
    %25 = vperm.xlu0 %24, %v21
    %v26 = vpop.permute.xlu0 %25
    %vm27 = vcmp.eq.s32.totalorder %v23, %v26
    %v28 = vsel %vm27, %v17, 0.0
    %v29 = vlaneseq
    %v30 = vshrl.u32 %v29, 7
    %vm31 = vcmp.eq.s32.totalorder %v30, 0
    %vm32 = vcmp.eq.s32.totalorder %v23, 0
    %vm33 = vmand %vm31, %vm32
    %vm34 = vcmask 261120
    %v35 = vsel %vm34, %v28, 0.0
    %36 = vadd.xlane.f32.xlu0 %v35
    %v37 = vpop.xlane.xlu0 %36
    %v38 = vrot.slane %v37, 4
    %v39 = vadd.f32 %v37, %v38
    %v40 = vrot.slane %v39, 2
    %v41 = vadd.f32 %v39, %v40
    %v42 = vrot.slane %v41, 1
    %v43 = vadd.f32 %v41, %v42
    %s44 = vtos %v43
    %v45 = vstv %s44
    %v46 = vsel %vm33, %v45, 0.0
    %v47 = vld [vmem:[#allocation2] sm:$0xff]
    %v48 = vadd.f32 %v47, %v46
    %49 = vst [vmem:[#allocation2] sm:$0xff] %v48
    // Predicated region
    $region14: #{tpu_custom_call.1} parent=1 // pred_check
      _
    $region15: #{tpu_custom_call.1} parent=1 // pred_check_branch
      %51 = sbr.rel (0) target = $region17
    $region16: #{tpu_custom_call.1} parent=1 // pred_region
      %s53 = ssub.s32 128, 128
      %54 = vsyncadd [#allocation3], %s53
      %s56 = sshll.u32 [#allocation2], 4
      %s57 = int_to_ptr.vmem [resolvable:$true] %s56
      %59 = dma.vmem_to_hbm [thread:$0]  %s57, 128, %s2, [#allocation3]
    $region17: #{tpu_custom_call.1} parent=1 // pred_fallthru
      _
    // Predicated region
    $region18: #{tpu_custom_call.1} parent=1 // pred_check
      _
    $region19: #{tpu_custom_call.1} parent=1 // pred_check_branch
      %61 = sbr.rel (0) target = $region21
    $region20: #{tpu_custom_call.1} parent=1 // pred_region
      %62 = dma.done [#allocation3], 128
    $region21: #{tpu_custom_call.1} parent=1 // pred_fallthru
      _
    %63 = vsyncpa [#allocation3], 1

</llo_original>
